<compile_context>
chip_gen: v5e
topology: v5e:2x2
jax: 0.10.0
libtpu: 0.0.40
codegen_flags: <defaults>
</compile_context>

<pallas_src>
import functools

import jax
import jax.numpy as jnp
import numpy as np
from jax.experimental import pallas as pl
from jax.experimental.pallas import tpu as pltpu


# ----------------------------------------------------------------------------
# Pallas kernel
# ----------------------------------------------------------------------------
def inpaint_kernel(u_ref, eps_ref, a_ref, bd_ref, out_ref, *, ch_lanes):
    """One batch tile.

    u_ref   : (H, Lt) with Lt = 4*bt*W — lanes folded as (channel, batch, w),
              mask channel in the trailing bt*W lanes.
    eps_ref : (1, Lt) per-image epsilon (unfiltered sum * 1e-8) per lane.
    a_ref   : (H, H)   vertical blur folded over reps   (A^reps @ u).
    bd_ref  : (Lt, Lt) block-diag horizontal blur folded over reps (u @ Bd).
    out_ref : (H, ch_lanes) — only the 3 colour-channel lane blocks.
    """
    x = u_ref[...].astype(jnp.float32)                                  # (H, Lt)
    y = jnp.dot(a_ref[...], x, preferred_element_type=jnp.float32)      # vertical
    y = jnp.dot(y, bd_ref[...], preferred_element_type=jnp.float32)     # horizontal
    y = y + eps_ref[...]                                                # + epsilon

    num = y[:, :ch_lanes]                     # colour channels (leading lanes)
    den = y[:, ch_lanes:]                     # filtered mask (trailing bt*W lanes)
    den = jnp.concatenate([den, den, den], axis=1)   # broadcast to 3 channels
    out_ref[...] = (num / den).astype(out_ref.dtype)


# ----------------------------------------------------------------------------
# Parameter construction helpers
# ----------------------------------------------------------------------------
def gaussian_taps(kernel_size, sigma):
    d = jnp.linspace(-(kernel_size - 1) / 2, (kernel_size - 1) / 2, kernel_size)
    g = jnp.exp(-0.5 * d**2 / sigma**2)
    return (g / jnp.sum(g)).astype(jnp.float32)


def band_matrix(n, g):
    """M[i, j] = g[j - i + pad] (zero outside the band)."""
    k = g.shape[0]
    pad = k // 2
    idx = jnp.arange(n)
    diff = idx[None, :] - idx[:, None] + pad
    valid = (diff >= 0) & (diff < k)
    return jnp.where(valid, g[jnp.clip(diff, 0, k - 1)], 0.0).astype(jnp.float32)


def pick_batch_tile(B, W, target_lanes=512):
    """Prefer >=2 grid steps (megacore/v7x), 128-aligned lanes, small (Lt,Lt)."""
    per = 4 * W
    divisors = [d for d in range(1, B + 1) if B % d == 0]

    def score(bt):
        lanes = bt * per
        return (
            B // bt >= 2,                    # leave work for the 2nd TensorCore
            lanes % 128 == 0,                # lane-dense stores
            lanes <= target_lanes,           # keep (Lt, Lt) horizontal matrix small
            -lanes if lanes > target_lanes else lanes,
        )

    return max(divisors, key=score)


def _vmem_limit_bytes(H, Lt, ch_lanes):
    """Size the scoped-VMEM request from actual operands (f32), clamp for v7x."""
    dbl_blocks = 2 * (H * Lt + Lt + H * ch_lanes)      # pipelined blocks (x2 buffers)
    consts = 2 * (H * H + Lt * Lt)                     # grid-invariant operands
    work = 2 * H * Lt + H * ch_lanes                   # in-body intermediates
    need = 4 * (dbl_blocks + consts + work) + (1 << 20)
    return int(min(max(need, 4 << 20), 48 << 20))      # 48 MiB fits v7x's 64 MiB


# ----------------------------------------------------------------------------
# pallas_call wrapper
# ----------------------------------------------------------------------------
def inpainter_forward(x, m, *, sigma, kernel_size, reps, scale_factor=1):
    assert scale_factor == 1  # Identity down/upsample path (module default).
    B, Cx, H, W = x.shape
    assert Cx == 3 and m.shape == (B, 1, H, W)

    bt = pick_batch_tile(B, W)
    nb = B // bt
    Lt = bt * 4 * W
    ch_lanes = bt * 3 * W

    # reps-folded separable blur operators.
    g = gaussian_taps(kernel_size, sigma)
    A = jnp.linalg.matrix_power(band_matrix(H, g), reps)          # (H, H)
    Bm = jnp.linalg.matrix_power(band_matrix(W, g).T, reps)       # (W, W)
    Bd = jnp.kron(jnp.eye(4 * bt, dtype=jnp.float32), Bm)         # (Lt, Lt)

    u = jnp.concatenate([x, m], axis=1).astype(jnp.float32)       # (B, 4, H, W)

    # epsilon on the unfiltered input (PyTorch semantics), laid out per lane.
    eps = jnp.sum(u, axis=(2, 3)) * 1e-8                          # (B, 4)
    eps_lanes = jnp.broadcast_to(
        eps.reshape(nb, bt, 4).transpose(0, 2, 1)[..., None],     # (nb, 4, bt, 1)
        (nb, 4, bt, W)).reshape(nb, 1, Lt)

    # (B, 4, H, W) -> (nb, H, 4*bt*W): lanes folded (channel, batch, w),
    # mask channel trailing within each tile.
    U = (u.reshape(nb, bt, 4, H, W)
          .transpose(0, 3, 2, 1, 4)                               # (nb, H, c, bt, W)
          .reshape(nb, H, Lt))

    out = pl.pallas_call(
        functools.partial(inpaint_kernel, ch_lanes=ch_lanes),
        out_shape=jax.ShapeDtypeStruct((nb, H, ch_lanes), x.dtype),
        grid=(nb,),
        in_specs=[
            pl.BlockSpec((None, H, Lt), lambda i: (i, 0, 0)),     # U tile
            pl.BlockSpec((None, 1, Lt), lambda i: (i, 0, 0)),     # epsilon
            pl.BlockSpec((H, H), lambda i: (0, 0)),               # vertical operator
            pl.BlockSpec((Lt, Lt), lambda i: (0, 0)),             # horizontal operator
        ],
        out_specs=pl.BlockSpec((None, H, ch_lanes), lambda i: (i, 0, 0)),
        compiler_params=pltpu.CompilerParams(
            dimension_semantics=("parallel",),
            vmem_limit_bytes=_vmem_limit_bytes(H, Lt, ch_lanes),
        ),
    )(U, eps_lanes, A, Bd)

    # (nb, H, 3*bt*W) -> (B, 3, H, W)
    return (out.reshape(nb, H, 3, bt, W)
               .transpose(0, 3, 2, 1, 4)
               .reshape(B, 3, H, W))


# ----------------------------------------------------------------------------
# Pure-JAX reference (mirrors F.conv2d depthwise separable Gaussian filter)
# ----------------------------------------------------------------------------
def inpainter_reference(x, m, *, sigma, kernel_size, reps):
    g = gaussian_taps(kernel_size, sigma)
    k = kernel_size
    pad = k // 2
    wv = jnp.tile(g.reshape(1, 1, k, 1), (4, 1, 1, 1))
    wh = jnp.tile(g.reshape(1, 1, 1, k), (4, 1, 1, 1))

    def gf(u):
        v = jax.lax.conv_general_dilated(
            u, wv, (1, 1), [(pad, pad), (0, 0)],
            dimension_numbers=("NCHW", "OIHW", "NCHW"), feature_group_count=4)
        h = jax.lax.conv_general_dilated(
            v, wh, (1, 1), [(0, 0), (pad, pad)],
            dimension_numbers=("NCHW", "OIHW", "NCHW"), feature_group_count=4)
        return h

    u = jnp.concatenate([x, m], axis=1)
    eps = jnp.sum(u, axis=(2, 3), keepdims=True) * 1e-8
    for _ in range(reps):
        u = gf(u)
    u = u + eps
    return u[:, :3] / u[:, 3:4]


# ----------------------------------------------------------------------------
if __name__ == "__main__":
    sigma, kernel_size, reps = 2.0, 5, 3
    B, H, W = 2, 16, 16

    key = jax.random.PRNGKey(0)
    kx, km = jax.random.split(key)
    x = jax.random.normal(kx, (B, 3, H, W), dtype=jnp.float32)
    m = jax.random.uniform(km, (B, 1, H, W), dtype=jnp.float32,
                           minval=0.2, maxval=1.0)

    fwd = jax.jit(functools.partial(inpainter_forward, sigma=sigma,
                                    kernel_size=kernel_size, reps=reps))
    out = jax.block_until_ready(fwd(x, m))

    ref = inpainter_reference(x, m, sigma=sigma, kernel_size=kernel_size, reps=reps)
    ref = jax.block_until_ready(ref)

    np.testing.assert_allclose(np.asarray(out), np.asarray(ref),
                               rtol=1e-4, atol=1e-5)
    print("KERNEL_OK")
</pallas_src>

<mosaic_0001>
module attributes {stable_mosaic.version = 11 : i64} {
  func.func @inpaint_kernel(%arg0: i32, %arg1: memref<1x16x64xf32, #tpu.memory_space<vmem>>, %arg2: memref<1x1x64xf32, #tpu.memory_space<vmem>>, %arg3: memref<16x16xf32, #tpu.memory_space<vmem>>, %arg4: memref<64x64xf32, #tpu.memory_space<vmem>>, %arg5: memref<1x16x48xf32, #tpu.memory_space<vmem>>) attributes {dimension_semantics = [#tpu.dimension_semantics<parallel>], iteration_bounds = array<i64: 2>, scalar_prefetch = 0 : i64, scratch_operands = 0 : i64, tpu.core_type = #tpu.core_type<tc>, window_params = [{transform_indices = @transform_0, window_bounds = array<i64: 1, 16, 64>}, {transform_indices = @transform_1, window_bounds = array<i64: 1, 1, 64>}, {pipeline_mode = #tpu.pipeline_mode<synchronous>, transform_indices = @transform_2, window_bounds = array<i64: 16, 16>}, {pipeline_mode = #tpu.pipeline_mode<synchronous>, transform_indices = @transform_3, window_bounds = array<i64: 64, 64>}, {transform_indices = @transform_4, window_bounds = array<i64: 1, 16, 48>}]} {
    %c0 = arith.constant 0 : index
    %c0_0 = arith.constant 0 : index
    %c0_1 = arith.constant 0 : index
    %0 = vector.load %arg1[%c0, %c0_0, %c0_1] : memref<1x16x64xf32, #tpu.memory_space<vmem>>, vector<1x16x64xf32>
    %1 = vector.shape_cast %0 : vector<1x16x64xf32> to vector<16x64xf32>
    %c0_2 = arith.constant 0 : index
    %c0_3 = arith.constant 0 : index
    %2 = vector.load %arg3[%c0_2, %c0_3] : memref<16x16xf32, #tpu.memory_space<vmem>>, vector<16x16xf32>
    %cst = arith.constant dense<0.000000e+00> : vector<16x64xf32>
    %3 = tpu.matmul %2, %1, %cst {dimension_numbers = #tpu.dot_dimension_numbers<[1], [0], [0], [1], [0, 0, 1, 1], [], []>} : vector<16x16xf32>, vector<16x64xf32>, vector<16x64xf32> -> vector<16x64xf32>
    %c0_4 = arith.constant 0 : index
    %c0_5 = arith.constant 0 : index
    %4 = vector.load %arg4[%c0_4, %c0_5] : memref<64x64xf32, #tpu.memory_space<vmem>>, vector<64x64xf32>
    %cst_6 = arith.constant dense<0.000000e+00> : vector<16x64xf32>
    %5 = tpu.matmul %3, %4, %cst_6 {dimension_numbers = #tpu.dot_dimension_numbers<[1], [0], [0], [1], [0, 0, 1, 1], [], []>} : vector<16x64xf32>, vector<64x64xf32>, vector<16x64xf32> -> vector<16x64xf32>
    %c0_7 = arith.constant 0 : index
    %c0_8 = arith.constant 0 : index
    %c0_9 = arith.constant 0 : index
    %6 = vector.load %arg2[%c0_7, %c0_8, %c0_9] : memref<1x1x64xf32, #tpu.memory_space<vmem>>, vector<1x1x64xf32>
    %7 = vector.shape_cast %6 : vector<1x1x64xf32> to vector<1x64xf32>
    %8 = vector.broadcast %7 : vector<1x64xf32> to vector<16x64xf32>
    %9 = arith.addf %5, %8 : vector<16x64xf32>
    %10 = vector.extract_strided_slice %9 {offsets = [0, 0], sizes = [16, 48], strides = [1, 1]} : vector<16x64xf32> to vector<16x48xf32>
    %11 = vector.extract_strided_slice %9 {offsets = [0, 48], sizes = [16, 16], strides = [1, 1]} : vector<16x64xf32> to vector<16x16xf32>
    %12 = tpu.concatenate %11, %11, %11 in 1 : vector<16x16xf32>, vector<16x16xf32>, vector<16x16xf32> -> vector<16x48xf32>
    %13 = arith.divf %10, %12 : vector<16x48xf32>
    %c0_10 = arith.constant 0 : index
    %c0_11 = arith.constant 0 : index
    %c0_12 = arith.constant 0 : index
    %14 = vector.load %arg5[%c0_10, %c0_11, %c0_12] : memref<1x16x48xf32, #tpu.memory_space<vmem>>, vector<1x16x48xf32>
    %15 = vector.shape_cast %14 : vector<1x16x48xf32> to vector<16x48xf32>
    %16 = vector.shape_cast %13 : vector<16x48xf32> to vector<1x16x48xf32>
    tpu.vector_store %arg5[%c0_10, %c0_11, %c0_12], %16 {strides = array<i32>} : memref<1x16x48xf32, #tpu.memory_space<vmem>>, vector<1x16x48xf32>,
    return
  }
  func.func @transform_0(%arg0: i32) -> (i32, i32, i32) {
    %c0_i32 = arith.constant 0 : i32
    %c0_i32_0 = arith.constant 0 : i32
    %c0_i32_1 = arith.constant 0 : i32
    return %arg0, %c0_i32, %c0_i32_0 : i32, i32, i32
  }
  func.func @transform_1(%arg0: i32) -> (i32, i32, i32) {
    %c0_i32 = arith.constant 0 : i32
    %c0_i32_0 = arith.constant 0 : i32
    %c0_i32_1 = arith.constant 0 : i32
    return %arg0, %c0_i32, %c0_i32_0 : i32, i32, i32
  }
  func.func @transform_2(%arg0: i32) -> (i32, i32) {
    %c0_i32 = arith.constant 0 : i32
    %c0_i32_0 = arith.constant 0 : i32
    %c0_i32_1 = arith.constant 0 : i32
    return %c0_i32, %c0_i32_0 : i32, i32
  }
  func.func @transform_3(%arg0: i32) -> (i32, i32) {
    %c0_i32 = arith.constant 0 : i32
    %c0_i32_0 = arith.constant 0 : i32
    %c0_i32_1 = arith.constant 0 : i32
    return %c0_i32, %c0_i32_0 : i32, i32
  }
  func.func @transform_4(%arg0: i32) -> (i32, i32, i32) {
    %c0_i32 = arith.constant 0 : i32
    %c0_i32_0 = arith.constant 0 : i32
    %c0_i32_1 = arith.constant 0 : i32
    return %arg0, %c0_i32, %c0_i32_0 : i32, i32, i32
  }
}

</mosaic_0001>

<llo_original>
// kernel: inpainter_forward.1
$region0: #{inpainter_forward.1}
  #allocation0 [shape = 'u32[]', space=smem, size = 0x4, offset = 0x4, fixed_abs, tag = 'smem constant byte address 0x4 - core index']
  #allocation1 [shape = 'u32[72,128]{1,0:T(1,128)}', space=vmem, size = 0x9000, scoped, tag = 'internal scratch']
  %s0 = inlined_call_operand.vmem [shape: f32[2,16,64], index: 0, kind: input, shape index: {}]
  %s1 = inlined_call_operand.vmem [shape: f32[2,1,64], index: 1, kind: input, shape index: {}]
  %s2 = inlined_call_operand.vmem [shape: f32[16,16], index: 2, kind: input, shape index: {}]
  %s3 = inlined_call_operand.vmem [shape: f32[64,64], index: 3, kind: input, shape index: {}]
  %s4 = inlined_call_operand.vmem [shape: f32[2,16,48], index: 4, kind: output, shape index: {}]
  %s5 = sld [smem:[#allocation0]]
  $region49: #{inpainter_forward.1} parent=0
    _
  %s7 = ssub.s32 1, %s5
  %s8 = scalar_select 0, %s7, %s5
  loop: start=0, step=1, limit=4
  $region2: #{inpainter_forward.1} parent=0 // loop_pre_header
    _
  $region3: #{inpainter_forward.1} parent=0 // loop_header
    %s10 = sphi 0, %s14
    %p11 = scmp.ge.s32.totalorder %s10, 4
    %s20 = sphi 0, %s22
    %s23 = sphi 0, %s20
    %s24 = sphi 0, %s23
    %s40 = sphi 0, %s24
    %s46 = sphi 0, %s48
    %s49 = sphi 0, %s46
    %s50 = sphi 0, %s49
    %s66 = sphi 0, %s50
    %s70 = sphi 0, %s70
    %s72 = sphi 0, %s70
    %s73 = sphi 0, %s72
    %s87 = sphi 0, %s73
    %s91 = sphi 0, %s91
    %s93 = sphi 0, %s91
    %s94 = sphi 0, %s93
    %s108 = sphi 0, %s94
    %s114 = sphi 0, %s116
    %s117 = sphi 0, %s114
    %s118 = sphi 0, %s117
    %s134 = sphi 0, %s118
  $region4: #{inpainter_forward.1} parent=0 // loop_header_branch
    %13 = sbr.rel (%p11) target = $region8
  $region5: #{inpainter_forward.1} parent=0 // loop_body
    %s15 = ssub.s32 %s10, 1
    %s16 = ssub.s32 %s10, 2
    %s17 = sadd.s32 %s10, 1
    %s18 = ssub.s32 %s10, %s17
    %p19 = scmp.eq.s32.totalorder %s18, 0
    %s21 = sadd.s32 %s20, 1
    %s22 = scalar_select %p19, %s20, %s21
    %p25 = pneg %p19
    %p26 = scmp.eq.s32.totalorder %s10, 1
    %p27 = por %p25, %p26
    %p28 = scmp.ne.s32.totalorder %s20, %s23
    %p29 = scmp.eq.s32.totalorder %s10, 0
    %p30 = por %p28, %p29
    %p31 = scmp.ne.s32.totalorder %s20, %s23
    %p32 = scmp.eq.s32.totalorder %s15, 1
    %p33 = por %p31, %p32
    %p34 = scmp.ne.s32.totalorder %s23, %s24
    %p35 = scmp.eq.s32.totalorder %s15, 0
    %p36 = por %p34, %p35
    %p37 = scmp.ne.s32.totalorder %s23, %s24
    %p38 = scmp.eq.s32.totalorder %s16, 1
    %p39 = por %p37, %p38
    %p41 = scmp.ne.s32.totalorder %s24, %s40
    %p42 = scmp.eq.s32.totalorder %s16, 0
    %p43 = por %p41, %p42
    %s44 = ssub.s32 %s10, %s17
    %p45 = scmp.eq.s32.totalorder %s44, 0
    %s47 = sadd.s32 %s46, 1
    %s48 = scalar_select %p45, %s46, %s47
    %p51 = pneg %p45
    %p52 = scmp.eq.s32.totalorder %s10, 1
    %p53 = por %p51, %p52
    %p54 = scmp.ne.s32.totalorder %s46, %s49
    %p55 = scmp.eq.s32.totalorder %s10, 0
    %p56 = por %p54, %p55
    %p57 = scmp.ne.s32.totalorder %s46, %s49
    %p58 = scmp.eq.s32.totalorder %s15, 1
    %p59 = por %p57, %p58
    %p60 = scmp.ne.s32.totalorder %s49, %s50
    %p61 = scmp.eq.s32.totalorder %s15, 0
    %p62 = por %p60, %p61
    %p63 = scmp.ne.s32.totalorder %s49, %s50
    %p64 = scmp.eq.s32.totalorder %s16, 1
    %p65 = por %p63, %p64
    %p67 = scmp.ne.s32.totalorder %s50, %s66
    %p68 = scmp.eq.s32.totalorder %s16, 0
    %p69 = por %p67, %p68
    %s71 = sadd.s32 %s70, 1
    %p74 = scmp.eq.s32.totalorder %s10, 1
    %p75 = scmp.ne.s32.totalorder %s70, %s72
    %p76 = scmp.eq.s32.totalorder %s10, 0
    %p77 = por %p75, %p76
    %p78 = scmp.ne.s32.totalorder %s70, %s72
    %p79 = scmp.eq.s32.totalorder %s15, 1
    %p80 = por %p78, %p79
    %p81 = scmp.ne.s32.totalorder %s72, %s73
    %p82 = scmp.eq.s32.totalorder %s15, 0
    %p83 = por %p81, %p82
    %p84 = scmp.ne.s32.totalorder %s72, %s73
    %p85 = scmp.eq.s32.totalorder %s16, 1
    %p86 = por %p84, %p85
    %p88 = scmp.ne.s32.totalorder %s73, %s87
    %p89 = scmp.eq.s32.totalorder %s16, 0
    %p90 = por %p88, %p89
    %s92 = sadd.s32 %s91, 1
    %p95 = scmp.eq.s32.totalorder %s10, 1
    %p96 = scmp.ne.s32.totalorder %s91, %s93
    %p97 = scmp.eq.s32.totalorder %s10, 0
    %p98 = por %p96, %p97
    %p99 = scmp.ne.s32.totalorder %s91, %s93
    %p100 = scmp.eq.s32.totalorder %s15, 1
    %p101 = por %p99, %p100
    %p102 = scmp.ne.s32.totalorder %s93, %s94
    %p103 = scmp.eq.s32.totalorder %s15, 0
    %p104 = por %p102, %p103
    %p105 = scmp.ne.s32.totalorder %s93, %s94
    %p106 = scmp.eq.s32.totalorder %s16, 1
    %p107 = por %p105, %p106
    %p109 = scmp.ne.s32.totalorder %s94, %s108
    %p110 = scmp.eq.s32.totalorder %s16, 0
    %p111 = por %p109, %p110
    %s112 = ssub.s32 %s10, %s17
    %p113 = scmp.eq.s32.totalorder %s112, 0
    %s115 = sadd.s32 %s114, 1
    %s116 = scalar_select %p113, %s114, %s115
    %p119 = pneg %p113
    %p120 = scmp.eq.s32.totalorder %s10, 1
    %p121 = por %p119, %p120
    %p122 = scmp.ne.s32.totalorder %s114, %s117
    %p123 = scmp.eq.s32.totalorder %s10, 0
    %p124 = por %p122, %p123
    %p125 = scmp.ne.s32.totalorder %s114, %s117
    %p126 = scmp.eq.s32.totalorder %s15, 1
    %p127 = por %p125, %p126
    %p128 = scmp.ne.s32.totalorder %s117, %s118
    %p129 = scmp.eq.s32.totalorder %s15, 0
    %p130 = por %p128, %p129
    %p131 = scmp.ne.s32.totalorder %s117, %s118
    %p132 = scmp.eq.s32.totalorder %s16, 1
    %p133 = por %p131, %p132
    %p135 = scmp.ne.s32.totalorder %s118, %s134
    %p136 = scmp.eq.s32.totalorder %s16, 0
    %p137 = por %p135, %p136
    %p138 = scmp.le.s32.totalorder 1, %s10
    %p139 = scmp.lt.s32.totalorder %s10, 3
    %p140 = pnand %p138, %p139
    %p141 = pneg %p140
    // Predicated region
    $region9: #{inpainter_forward.1} parent=5 // pred_check
      _
    $region10: #{inpainter_forward.1} parent=5 // pred_check_branch
      %143 = sbr.rel (%p140) target = $region12
    $region11: #{inpainter_forward.1} parent=5 // pred_region
      %s144 = ssub.s32 %s10, 1
      // Predicated region
      $region13: #{inpainter_forward.1} parent=11 // pred_check
        %p145 = pneg %p83
      $region14: #{inpainter_forward.1} parent=11 // pred_check_branch
        %147 = sbr.rel (%p145) target = $region16
      $region15: #{inpainter_forward.1} parent=11 // pred_region
        _
      $region16: #{inpainter_forward.1} parent=11 // pred_fallthru
        _
      // Predicated region
      $region17: #{inpainter_forward.1} parent=11 // pred_check
        %p148 = pneg %p104
      $region18: #{inpainter_forward.1} parent=11 // pred_check_branch
        %150 = sbr.rel (%p148) target = $region20
      $region19: #{inpainter_forward.1} parent=11 // pred_region
        _
      $region20: #{inpainter_forward.1} parent=11 // pred_fallthru
        _
    $region12: #{inpainter_forward.1} parent=5 // pred_fallthru
      _
    %p151 = scmp.lt.s32.totalorder %s10, 2
    // Predicated region
    $region21: #{inpainter_forward.1} parent=5 // pred_check
      %p152 = pneg %p151
    $region22: #{inpainter_forward.1} parent=5 // pred_check_branch
      %154 = sbr.rel (%p152) target = $region24
    $region23: #{inpainter_forward.1} parent=5 // pred_region
      // Predicated region
      $region25: #{inpainter_forward.1} parent=23 // pred_check
        %p155 = pneg %p30
      $region26: #{inpainter_forward.1} parent=23 // pred_check_branch
        %157 = sbr.rel (%p155) target = $region28
      $region27: #{inpainter_forward.1} parent=23 // pred_region
        %p158 = scmp.lt.s32.totalorder %s10, 1
        %s159 = scalar_select %p158, %s10, 1
        %s160 = smul.addr %s159, 2
        %s161 = smul.addr %s160, 8
        %s162 = scalar_lea.vmem %s0, %s161
      $region28: #{inpainter_forward.1} parent=23 // pred_fallthru
        _
      // Predicated region
      $region29: #{inpainter_forward.1} parent=23 // pred_check
        %p163 = pneg %p56
      $region30: #{inpainter_forward.1} parent=23 // pred_check_branch
        %165 = sbr.rel (%p163) target = $region32
      $region31: #{inpainter_forward.1} parent=23 // pred_region
        %p166 = scmp.lt.s32.totalorder %s10, 1
        %s167 = scalar_select %p166, %s10, 1
        %s168 = scalar_lea.vmem %s1, %s167
      $region32: #{inpainter_forward.1} parent=23 // pred_fallthru
        _
    $region24: #{inpainter_forward.1} parent=5 // pred_fallthru
      _
    %p169 = scmp.le.s32.totalorder 1, %s10
    %p170 = scmp.lt.s32.totalorder %s10, 3
    %p171 = pnand %p169, %p170
    %p172 = pneg %p171
    // Predicated region
    $region33: #{inpainter_forward.1} parent=5 // pred_check
      _
    $region34: #{inpainter_forward.1} parent=5 // pred_check_branch
      %174 = sbr.rel (%p171) target = $region36
    $region35: #{inpainter_forward.1} parent=5 // pred_region
      %s175 = ssub.s32 %s10, 1
      %p176 = scmp.lt.s32.totalorder %s15, 1
      %s177 = scalar_select %p176, %s15, 1
      %s178 = smul.addr %s177, 2
      %s179 = smul.addr %s178, 8
      %s180 = scalar_lea.vmem %s0, %s179
      %p181 = pneg %p36
      %p182 = pneg %p33
      %p183 = scmp.lt.s32.totalorder %s15, 1
      %s184 = scalar_select %p183, %s15, 1
      %s185 = scalar_lea.vmem %s1, %s184
      %p186 = pneg %p62
      %p187 = pneg %p59
      %p188 = pneg %p83
      %p189 = pneg %p80
      %p190 = pneg %p104
      %p191 = pneg %p101
      %p192 = pneg %p130
      %p193 = pneg %p127
      %p194 = scmp.lt.s32.totalorder %s15, 1
      %s195 = scalar_select %p194, %s15, 1
      %s196 = smul.addr %s195, 2
      %s197 = smul.addr %s196, 8
      %s198 = scalar_lea.vmem %s4, %s197
      %p199 = scmp.lt.s32.totalorder %s15, 1
      %s200 = scalar_select %p199, %s15, 1
      %s201 = smul.addr %s200, 2
      %s202 = smul.addr %s201, 8
      %s203 = scalar_lea.vmem %s0, %s202
      %p204 = scmp.lt.s32.totalorder %s15, 1
      %s205 = scalar_select %p204, %s15, 1
      %s206 = scalar_lea.vmem %s1, %s205
      %p207 = scmp.lt.s32.totalorder %s15, 1
      %s208 = scalar_select %p207, %s15, 1
      %s209 = smul.addr %s208, 2
      %s210 = smul.addr %s209, 8
      %s211 = scalar_lea.vmem %s4, %s210
      %v212 = vld [vmem:[%s203] sm:$0xff]
      %v213 = vld [vmem:[%s203 + $0x8] sm:$0xff]
      %v214 = vld [vmem:[%s2] sm:$0xff]
      %v215 = vld [vmem:[%s2 + $0x8] sm:$0xff]
      %vm216 = vcmask 130048
      %v218 = vsel %vm216, %v214, 0
      %v221 = vsel %vm216, %v215, 0
      %223 = vmatpush.msra.mxu0 0.0
      %224 = vmatpush.msra.mxu0 0.0
      %225 = vmatpush.msra.mxu0 0.0
      %226 = vmatpush.msra.mxu0 0.0
      %227 = vmatpush.msra.mxu0 0.0
      %228 = vmatpush.msra.mxu0 0.0
      %229 = vmatpush.msra.mxu0 0.0
      %230 = vmatpush.msra.mxu0 0.0
      %231 = vmatpush.msra.mxu0 0.0
      %232 = vmatpush.msra.mxu0 0.0
      %233 = vmatpush.msra.mxu0 0.0
      %234 = vmatpush.msra.mxu0 0.0
      %235 = vmatpush.msra.mxu0 0.0
      %236 = vmatpush.msra.mxu0 0.0
      %237 = vmatpush.msra.mxu0 %v213
      %238 = vmatpush.msra.mxu0 %v212
      %239 = vmatmul.f32.gmra.mxu0 %v218
      %v240 = vpop.f32.mrf.mxu0
      %v241 = vadd.f32 0.0, %v240
      %242 = vmatmul.f32.gmra.mxu0 %v221
      %v243 = vpop.f32.mrf.mxu0
      %v244 = vadd.f32 0.0, %v243
      %245 = vdwg.mxu0
      %v246 = vld [vmem:[%s3] sm:$0xff]
      %v247 = vld [vmem:[%s3 + $0x8] sm:$0xff]
      %v248 = vld [vmem:[%s3 + $0x10] sm:$0xff]
      %v249 = vld [vmem:[%s3 + $0x18] sm:$0xff]
      %v250 = vld [vmem:[%s3 + $0x20] sm:$0xff]
      %v251 = vld [vmem:[%s3 + $0x28] sm:$0xff]
      %v252 = vld [vmem:[%s3 + $0x30] sm:$0xff]
      %v253 = vld [vmem:[%s3 + $0x38] sm:$0xff]
      %v254 = vld [vmem:[%s206] sm:$0x1]
      %v256 = vperm.slane %v254, 0
      %vm258 = vcmask 523264
      %v260 = vsel %vm258, %v241, 0
      %v263 = vsel %vm258, %v244, 0
      %265 = vmatpush.msra.mxu0 0.0
      %266 = vmatpush.msra.mxu0 0.0
      %267 = vmatpush.msra.mxu0 0.0
      %268 = vmatpush.msra.mxu0 0.0
      %269 = vmatpush.msra.mxu0 0.0
      %270 = vmatpush.msra.mxu0 0.0
      %271 = vmatpush.msra.mxu0 0.0
      %272 = vmatpush.msra.mxu0 0.0
      %273 = vmatpush.msra.mxu0 %v253
      %274 = vmatpush.msra.mxu0 %v252
      %275 = vmatpush.msra.mxu0 %v251
      %276 = vmatpush.msra.mxu0 %v250
      %277 = vmatpush.msra.mxu0 %v249
      %278 = vmatpush.msra.mxu0 %v248
      %279 = vmatpush.msra.mxu0 %v247
      %280 = vmatpush.msra.mxu0 %v246
      %281 = vmatmul.f32.gmra.mxu0 %v260
      %v282 = vpop.f32.mrf.mxu0
      %v283 = vadd.f32 %v256, %v282
      %284 = vmatmul.f32.gmra.mxu0 %v263
      %v285 = vpop.f32.mrf.mxu0
      %v286 = vadd.f32 %v256, %v285
      %287 = vdwg.mxu0
      %290 = vrot.lane.b32.xlu0 %v283, 80
      %v291 = vpop.permute.xlu0 %290
      %292 = vrot.lane.b32.xlu0 %v286, 80
      %v293 = vpop.permute.xlu0 %292
      %296 = vrot.lane.b32.xlu0 %v283, 96
      %v297 = vpop.permute.xlu0 %296
      %298 = vrot.lane.b32.xlu0 %v286, 96
      %v299 = vpop.permute.xlu0 %298
      %302 = vrot.lane.b32.xlu0 %v283, 112
      %v303 = vpop.permute.xlu0 %302
      %304 = vrot.lane.b32.xlu0 %v286, 112
      %v305 = vpop.permute.xlu0 %304
      %v308 = vsel %vm216, %v291, %v297
      %v309 = vsel %vm216, %v293, %v299
      %vm310 = vcmask 261120
      %v311 = vsel %vm310, %v308, %v303
      %v312 = vsel %vm310, %v309, %v305
      %v313 = vrcp.pop %v311
      %v314 = vmul.f32 %v311, %v313
      %v315 = vsub.f32 1.0, %v314
      %v316 = vmul.f32 %v313, %v315
      %v317 = vadd.f32 %v313, %v316
      %vm318 = vweird.f32 %v311
      %vm319 = vweird.f32 %v313
      %vm320 = vmor %vm318, %vm319
      %v321 = vsel %vm320, %v313, %v317
      %v322 = vand.u32 2147483647, %v311
      %vm323 = vcmp.eq.f32.partialorder %v322, 8.507059e+37
      %v324 = vand.u32 %v311, 2147483648
      %v325 = vor.u32 1.1754944e-38, %v324
      %v326 = vsel %vm323, %v325, %v321
      %v327 = vmul.f32 %v283, %v326
      %v328 = vrcp.pop %v312
      %v329 = vmul.f32 %v312, %v328
      %v330 = vsub.f32 1.0, %v329
      %v331 = vmul.f32 %v328, %v330
      %v332 = vadd.f32 %v328, %v331
      %vm333 = vweird.f32 %v312
      %vm334 = vweird.f32 %v328
      %vm335 = vmor %vm333, %vm334
      %v336 = vsel %vm335, %v328, %v332
      %v337 = vand.u32 2147483647, %v312
      %vm338 = vcmp.eq.f32.partialorder %v337, 8.507059e+37
      %v339 = vand.u32 %v312, 2147483648
      %v340 = vor.u32 1.1754944e-38, %v339
      %v341 = vsel %vm338, %v340, %v336
      %v342 = vmul.f32 %v286, %v341
      %vm343 = vcmask 392192
      %344 = vst.msk [vmem:[%s211] sm:$0xff] %vm343, %v327
      %345 = vst.msk [vmem:[%s211 + $0x8] sm:$0xff] %vm343, %v342
      %p346 = scmp.lt.s32.totalorder %s15, 1
      %s347 = scalar_select %p346, %s15, 1
      %s348 = smul.addr %s347, 2
      %s349 = smul.addr %s348, 8
      %s350 = scalar_lea.vmem %s4, %s349
      // Predicated region
      $region37: #{inpainter_forward.1} parent=35 // pred_check
        %p351 = pneg %p127
      $region38: #{inpainter_forward.1} parent=35 // pred_check_branch
        %353 = sbr.rel (%p351) target = $region40
      $region39: #{inpainter_forward.1} parent=35 // pred_region
        _
      $region40: #{inpainter_forward.1} parent=35 // pred_fallthru
        _
    $region36: #{inpainter_forward.1} parent=5 // pred_fallthru
      _
    %p354 = scmp.le.s32.totalorder 2, %s10
    // Predicated region
    $region41: #{inpainter_forward.1} parent=5 // pred_check
      %p355 = pneg %p354
    $region42: #{inpainter_forward.1} parent=5 // pred_check_branch
      %357 = sbr.rel (%p355) target = $region44
    $region43: #{inpainter_forward.1} parent=5 // pred_region
      %s358 = ssub.s32 %s10, 2
      // Predicated region
      $region45: #{inpainter_forward.1} parent=43 // pred_check
        %p359 = pneg %p133
      $region46: #{inpainter_forward.1} parent=43 // pred_check_branch
        %361 = sbr.rel (%p359) target = $region48
      $region47: #{inpainter_forward.1} parent=43 // pred_region
        %p362 = scmp.lt.s32.totalorder %s16, 1
        %s363 = scalar_select %p362, %s16, 1
        %s364 = smul.addr %s363, 2
        %s365 = smul.addr %s364, 8
        %s366 = scalar_lea.vmem %s4, %s365
      $region48: #{inpainter_forward.1} parent=43 // pred_fallthru
        _
    $region44: #{inpainter_forward.1} parent=5 // pred_fallthru
      _
  $region6: #{inpainter_forward.1} parent=0 // loop_footer
    %s14 = sadd.s32 1, %s10
  $region7: #{inpainter_forward.1} parent=0 // loop_footer_branch
    %9 = sbr.rel target = $region3
  $region8: #{inpainter_forward.1} parent=0 // loop_exit
    _

</llo_original>
